<compile_context>
chip_gen: v6e
topology: v6e:2x2x1
jax: 0.10.0
libtpu: 0.0.40
codegen_flags: <defaults>
</compile_context>

<pallas_src>
import jax
import jax.numpy as jnp
from jax.experimental import pallas as pl
from jax.experimental.pallas import tpu as pltpu


def _dma_copy_kernel(x_ref, o_ref, sem):
    # Single whole-array HBM->HBM DMA. HBM<->HBM descriptors have no lane /
    # sublane alignment requirement, so any shape (including ragged sizes like
    # (2,3,5,7)) is copied directly — the old pad + strip-slice path and its
    # ~3x HBM traffic are gone, as is all vld/vst slot usage.
    cp = pltpu.make_async_copy(x_ref, o_ref, sem)
    cp.start()
    cp.wait()


def _materialized_identity(x):
    nbytes = x.size * jnp.dtype(x.dtype).itemsize
    return pl.pallas_call(
        _dma_copy_kernel,
        out_shape=jax.ShapeDtypeStruct(x.shape, x.dtype),
        # Leave both operands in HBM; the kernel body drives the copy itself.
        in_specs=[pl.BlockSpec(memory_space=pl.ANY)],
        out_specs=pl.BlockSpec(memory_space=pl.ANY),
        scratch_shapes=[pltpu.SemaphoreType.DMA],
        # Advisory hint so XLA schedules surrounding ops around the call:
        # one full read + one full write of the array.
        cost_estimate=pl.CostEstimate(
            flops=0, transcendentals=0, bytes_accessed=2 * nbytes),
    )(x)


def make_input_module(shape):
    """Callable mimicking aka Input(shape).forward.

    forward(inputs)                    -> zero-copy pass-through (module
                                          semantics; zero HBM traffic).
    forward(inputs, materialize=True)  -> distinct output buffer produced by a
                                          single HBM->HBM Pallas DMA kernel.
    """
    expected = tuple(shape)
    materialized = jax.jit(_materialized_identity)

    def forward(inputs, materialize=False):
        if tuple(inputs.shape[1:]) != expected:
            raise BaseException(
                'Input shape error. Except: ', expected,
                ', But found :', tuple(inputs.shape[1:]))
        if not materialize:
            # Identity module: return the input untouched (optimal path).
            return inputs
        return materialized(inputs)

    return forward


if __name__ == "__main__":
    key = jax.random.PRNGKey(0)
    B, C, H, W = 2, 4, 16, 16
    x = jax.random.normal(key, (B, C, H, W), dtype=jnp.float32)

    input_module = make_input_module((C, H, W))

    # Default path: pure pass-through (zero traffic).
    y_fast = input_module(x)
    assert y_fast.shape == x.shape and y_fast.dtype == x.dtype
    assert bool(jnp.all(y_fast == x))

    # Materialized path: single HBM->HBM DMA into a fresh output buffer.
    y = jax.block_until_ready(input_module(x, materialize=True))
    assert y.shape == x.shape and y.dtype == x.dtype
    assert bool(jnp.all(y == x))

    # Ragged / unaligned shape: DMA copies it directly, no padding, no slicing.
    x2 = jax.random.normal(jax.random.PRNGKey(0), (2, 3, 5, 7), dtype=jnp.float32)
    ragged_module = make_input_module((3, 5, 7))
    y2 = jax.block_until_ready(ragged_module(x2, materialize=True))
    assert y2.shape == x2.shape
    assert bool(jnp.all(y2 == x2))

    # Shape-mismatch path raises, matching the PyTorch module semantics.
    try:
        make_input_module((C, H, W + 1))(x)
        raise AssertionError("expected shape-check failure")
    except AssertionError:
        raise
    except BaseException:  # noqa: B036 - module raises bare BaseException
        pass

    print("KERNEL_OK")
</pallas_src>

<mosaic_0001>
module attributes {stable_mosaic.version = 11 : i64} {
  func.func @_dma_copy_kernel(%arg0: memref<2x4x16x16xf32, #tpu.memory_space<any>>, %arg1: memref<2x4x16x16xf32, #tpu.memory_space<any>>, %arg2: memref<!tpu.dma_semaphore, #tpu.memory_space<semaphore_mem>>) attributes {dimension_semantics = [], scalar_prefetch = 0 : i64, scratch_operands = 1 : i64, tpu.core_type = #tpu.core_type<tc>} {
    tpu.enqueue_dma source(%arg0 : memref<2x4x16x16xf32, #tpu.memory_space<any>>) target(%arg1 : memref<2x4x16x16xf32, #tpu.memory_space<any>>) target_semaphore(%arg2 : memref<!tpu.dma_semaphore, #tpu.memory_space<semaphore_mem>>)
    tpu.wait_dma2 semaphore(%arg2 : memref<!tpu.dma_semaphore, #tpu.memory_space<semaphore_mem>>) src(%arg0 : memref<2x4x16x16xf32, #tpu.memory_space<any>>) dst(%arg1 : memref<2x4x16x16xf32, #tpu.memory_space<any>>)
    return
  }
}

</mosaic_0001>

<llo_original>
// kernel: _materialized_identity.1
$region0: #{_materialized_identity.1}
  #allocation0 [shape = 'u32[]', space=smem, size = 0x4, offset = 0x4, fixed_abs, tag = 'smem constant byte address 0x4 - core index']
  #allocation1 [shape = 'u32[144,128]{1,0:T(1,128)}', space=vmem, size = 0x12000, scoped, tag = 'internal scratch']
  #allocation2 [shape = 's32[1]{0}', space=sflag, size = 0x4, scoped, tag = 'scratch operand']
  #allocation3 [shape = 's32[]', space=sflag, size = 0x4, offset = 0, fixed_abs, tag = 'sflag constant byte address 0x0 - dummy sync flag']
  #allocation4 [shape = 'u32[0]{0}', space=smem, size = 0, offset = 0, fixed_abs, tag = 'smem constant byte address 0x0 - null']
  %s0 = inlined_call_operand.hbm [shape: f32[2,4,16,16], index: 0, kind: input, shape index: {}]
  %s1 = inlined_call_operand.hbm [shape: f32[2,4,16,16], index: 1, kind: output, shape index: {}]
  %s2 = sld [smem:[#allocation0]]
  $region2: #{_materialized_identity.1} parent=0
    _
  %s4 = ssub.s32 1, %s2
  %s5 = scalar_select 0, %s4, %s2
  %s7 = sshll.u32 1, 14
  %s8 = sxor.u32 4294967295, %s7
  %12 = dma.general %s0, 2048, %s1, [#allocation2], 131072, [#allocation4], 0, 0
  %s13 = smul.u32 2, 4
  %s14 = smul.u32 %s13, 16
  %s15 = smul.u32 %s14, 1
  %s16 = sshll.u32 %s15, 4
  %17 = dma.done [#allocation2], %s16
  %18 = vsyncmov [#allocation2]
  %s19 = vpop.sfrf %18
  %p20 = scmp.eq.s32.totalorder %s19, 0
  %p21 = pneg %p20
  %23 = shalt.err (%p21)

</llo_original>
